<compile_context>
chip_gen: v6e
topology: v6e:2x2x1
jax: 0.10.0
libtpu: 0.0.40
codegen_flags: <defaults>
</compile_context>

<pallas_src>
import jax
import jax.numpy as jnp
from jax.experimental import pallas as pl
from jax.experimental.pallas import tpu as pltpu

LANE = 128


def fasttext_kernel(ids_ref, emb_ref, w1_ref, w2_ref, p_ref, out_ref):
    ids = ids_ref[...]                              # [B, S] int32
    B, S = ids.shape
    V, D = emb_ref.shape
    H = w1_ref.shape[1]
    Lp = w2_ref.shape[1]

    # --- unpack packed small-parameter slab ([4, Lp], built once host-side) --
    p = p_ref[...]
    b1 = p[0:1, :H]                                 # [1, H]
    gamma = p[1:2, :H]                              # [1, H]
    beta = p[2:3, :H]                               # [1, H]
    b2 = p[3:4, :Lp]                                # [1, Lp]

    # --- fused embedding-gather + mean-pool as a bag-of-words matmul ---------
    # One broadcast compare [B, S, V] (V on lanes) with the 1/S mean weight
    # folded in, reduced over S, then a single [B, V] @ [V, D] MXU matmul.
    # Out-of-range ids contribute nothing (same as the one-hot formulation).
    vocab_iota = jax.lax.broadcasted_iota(jnp.int32, (B, S, V), 2)
    eq = ids[:, :, None] == vocab_iota              # [B, S, V] bool
    bow = jnp.sum(jnp.where(eq, 1.0 / S, 0.0), axis=1)          # [B, V]
    pooled = jnp.dot(bow, emb_ref[...],
                     preferred_element_type=jnp.float32)         # [B, D]

    # --- Linear(D, H) ---------------------------------------------------------
    h = jnp.dot(pooled, w1_ref[...], preferred_element_type=jnp.float32) + b1

    # --- BatchNorm1d(H): training-mode batch stats, biased var, eps=1e-5 ------
    # Two-pass variance (cancellation-safe), folded to one scale+shift.
    mu = jnp.mean(h, axis=0, keepdims=True)                      # [1, H]
    d = h - mu
    var = jnp.mean(d * d, axis=0, keepdims=True)                 # [1, H]
    scale = gamma * jax.lax.rsqrt(var + 1e-5)                    # [1, H]
    shift = beta - mu * scale                                    # [1, H]

    # --- BN + ReLU fused -------------------------------------------------------
    h = jnp.maximum(h * scale + shift, 0.0)

    # --- Linear(H, Lp): lane-dense padded output store ------------------------
    out_ref[...] = jnp.dot(h, w2_ref[...],
                           preferred_element_type=jnp.float32) + b2


def prepare_params(emb, w1, b1, gamma, beta, w2, b2):
    """One-time parameter prep: pad output features to a lane multiple and pack
    the small vectors into a single [4, Lp] slab.  Done once at setup, NOT per
    forward call."""
    H = w1.shape[1]
    L = w2.shape[1]
    Lp = ((L + LANE - 1) // LANE) * LANE
    assert H <= Lp, "packed slab assumes hidden_size fits in the padded label width"

    w2p = jnp.zeros((H, Lp), jnp.float32).at[:, :L].set(w2.astype(jnp.float32))
    slab = jnp.zeros((4, Lp), jnp.float32)
    slab = slab.at[0, :H].set(b1.reshape(-1).astype(jnp.float32))
    slab = slab.at[1, :H].set(gamma.reshape(-1).astype(jnp.float32))
    slab = slab.at[2, :H].set(beta.reshape(-1).astype(jnp.float32))
    slab = slab.at[3, :L].set(b2.reshape(-1).astype(jnp.float32))

    return {
        "emb": emb.astype(jnp.float32),
        "w1": w1.astype(jnp.float32),
        "w2p": w2p,
        "slab": slab,
        "label_size": L,
    }


def fasttext_forward_padded(ids, params):
    """Returns the padded [B, Lp] logits; the caller slices [:, :label_size]
    (padded columns are exactly zero-weighted, hence exact)."""
    ids = ids.astype(jnp.int32)
    B, S = ids.shape
    emb, w1, w2p, slab = params["emb"], params["w1"], params["w2p"], params["slab"]
    V, D = emb.shape
    H = w1.shape[1]
    Lp = w2p.shape[1]

    vmem = pl.BlockSpec(memory_space=pltpu.MemorySpace.VMEM)

    flops = B * S * V + 2 * (B * V * D + B * D * H + B * H * Lp)
    bytes_accessed = 4 * (B * S + V * D + D * H + H * Lp + 4 * Lp + B * Lp)
    cost = pl.CostEstimate(flops=int(flops), transcendentals=int(H),
                           bytes_accessed=int(bytes_accessed))

    return pl.pallas_call(
        fasttext_kernel,
        out_shape=jax.ShapeDtypeStruct((B, Lp), jnp.float32),
        in_specs=[vmem] * 5,
        out_specs=vmem,
        compiler_params=pltpu.CompilerParams(vmem_limit_bytes=4 * 1024 * 1024),
        cost_estimate=cost,
    )(ids, emb, w1, w2p, slab)


if __name__ == "__main__":
    # Small, deterministic configuration consistent with the module's __init__.
    VOCAB = 128      # len(vocab)
    VEC_DIM = 32     # vec_dim
    HIDDEN = 32      # hidden_size
    LABELS = 4       # label_size
    BATCH = 8
    SEQ = 8

    key = jax.random.PRNGKey(0)
    k_ids, k_emb, k_w1, k_b1, k_w2, k_b2 = jax.random.split(key, 6)

    ids = jax.random.randint(k_ids, (BATCH, SEQ), 0, VOCAB, dtype=jnp.int32)
    emb = jax.random.normal(k_emb, (VOCAB, VEC_DIM), dtype=jnp.float32)
    # Linear weights stored [in, out] (transpose of PyTorch's [out, in]).
    w1 = jax.random.normal(k_w1, (VEC_DIM, HIDDEN), dtype=jnp.float32) * 0.1
    b1 = jax.random.normal(k_b1, (1, HIDDEN), dtype=jnp.float32) * 0.1
    gamma = jnp.ones((1, HIDDEN), dtype=jnp.float32)   # BN weight init
    beta = jnp.zeros((1, HIDDEN), dtype=jnp.float32)   # BN bias init
    w2 = jax.random.normal(k_w2, (HIDDEN, LABELS), dtype=jnp.float32) * 0.1
    b2 = jax.random.normal(k_b2, (1, LABELS), dtype=jnp.float32) * 0.1

    # One-time parameter prep (padding/packing hoisted out of the forward).
    params = prepare_params(emb, w1, b1, gamma, beta, w2, b2)

    out_padded = fasttext_forward_padded(ids, params)
    out_padded = jax.block_until_ready(out_padded)
    out = out_padded[:, :params["label_size"]]        # single consumer-side slice

    # Pure-JAX reference for sanity.
    ref_emb = jnp.take(emb, ids, axis=0)               # [B, S, D]
    pooled = jnp.mean(ref_emb, axis=1)                 # [B, D]
    h = pooled @ w1 + b1
    mu = jnp.mean(h, axis=0, keepdims=True)
    var = jnp.mean((h - mu) ** 2, axis=0, keepdims=True)
    h = (h - mu) / jnp.sqrt(var + 1e-5) * gamma + beta
    h = jnp.maximum(h, 0.0)
    ref = h @ w2 + b2

    assert out.shape == (BATCH, LABELS)
    assert jnp.allclose(out, ref, atol=5e-4, rtol=5e-4), (
        f"max abs err = {jnp.max(jnp.abs(out - ref))}")
    print("KERNEL_OK")
</pallas_src>

<mosaic_0001>
module attributes {stable_mosaic.version = 11 : i64} {
  func.func @fasttext_kernel(%arg0: memref<8x8xi32, #tpu.memory_space<vmem>>, %arg1: memref<128x32xf32, #tpu.memory_space<vmem>>, %arg2: memref<32x32xf32, #tpu.memory_space<vmem>>, %arg3: memref<32x128xf32, #tpu.memory_space<vmem>>, %arg4: memref<4x128xf32, #tpu.memory_space<vmem>>, %arg5: memref<8x128xf32, #tpu.memory_space<vmem>>) attributes {dimension_semantics = [], scalar_prefetch = 0 : i64, scratch_operands = 0 : i64, tpu.core_type = #tpu.core_type<tc>} {
    %c0 = arith.constant 0 : index
    %c0_0 = arith.constant 0 : index
    %0 = vector.load %arg0[%c0, %c0_0] : memref<8x8xi32, #tpu.memory_space<vmem>>, vector<8x8xi32>
    %c0_1 = arith.constant 0 : index
    %c0_2 = arith.constant 0 : index
    %1 = vector.load %arg4[%c0_1, %c0_2] : memref<4x128xf32, #tpu.memory_space<vmem>>, vector<4x128xf32>
    %2 = vector.extract_strided_slice %1 {offsets = [0, 0], sizes = [1, 32], strides = [1, 1]} : vector<4x128xf32> to vector<1x32xf32>
    %3 = vector.extract_strided_slice %1 {offsets = [1, 0], sizes = [1, 32], strides = [1, 1]} : vector<4x128xf32> to vector<1x32xf32>
    %4 = vector.extract_strided_slice %1 {offsets = [2, 0], sizes = [1, 32], strides = [1, 1]} : vector<4x128xf32> to vector<1x32xf32>
    %5 = vector.extract_strided_slice %1 {offsets = [3, 0], sizes = [1, 128], strides = [1, 1]} : vector<4x128xf32> to vector<1x128xf32>
    %6 = tpu.iota {dimensions = array<i32: 2>} : vector<8x8x128xi32>
    %7 = vector.shape_cast %0 : vector<8x8xi32> to vector<8x8x1xi32>
    %8 = vector.broadcast %7 : vector<8x8x1xi32> to vector<8x8x128xi32>
    %9 = arith.cmpi eq, %8, %6 : vector<8x8x128xi32>
    %cst = arith.constant 1.250000e-01 : f32
    %cst_3 = arith.constant 0.000000e+00 : f32
    %10 = vector.broadcast %cst : f32 to vector<8x8x128xf32>
    %11 = vector.broadcast %cst_3 : f32 to vector<8x8x128xf32>
    %12 = arith.select %9, %10, %11 : vector<8x8x128xi1>, vector<8x8x128xf32>
    %cst_4 = arith.constant dense<0.000000e+00> : vector<8x128xf32>
    %13 = vector.multi_reduction <add>, %12, %cst_4 [1] : vector<8x8x128xf32> to vector<8x128xf32>
    %c0_5 = arith.constant 0 : index
    %c0_6 = arith.constant 0 : index
    %14 = vector.load %arg1[%c0_5, %c0_6] : memref<128x32xf32, #tpu.memory_space<vmem>>, vector<128x32xf32>
    %cst_7 = arith.constant dense<0.000000e+00> : vector<8x32xf32>
    %15 = tpu.matmul %13, %14, %cst_7 {dimension_numbers = #tpu.dot_dimension_numbers<[1], [0], [0], [1], [0, 0, 1, 1], [], []>} : vector<8x128xf32>, vector<128x32xf32>, vector<8x32xf32> -> vector<8x32xf32>
    %c0_8 = arith.constant 0 : index
    %c0_9 = arith.constant 0 : index
    %16 = vector.load %arg2[%c0_8, %c0_9] : memref<32x32xf32, #tpu.memory_space<vmem>>, vector<32x32xf32>
    %cst_10 = arith.constant dense<0.000000e+00> : vector<8x32xf32>
    %17 = tpu.matmul %15, %16, %cst_10 {dimension_numbers = #tpu.dot_dimension_numbers<[1], [0], [0], [1], [0, 0, 1, 1], [], []>} : vector<8x32xf32>, vector<32x32xf32>, vector<8x32xf32> -> vector<8x32xf32>
    %18 = vector.broadcast %2 : vector<1x32xf32> to vector<8x32xf32>
    %19 = arith.addf %17, %18 : vector<8x32xf32>
    %cst_11 = arith.constant dense<0.000000e+00> : vector<32xf32>
    %20 = vector.multi_reduction <add>, %19, %cst_11 [0] : vector<8x32xf32> to vector<32xf32>
    %21 = vector.shape_cast %20 : vector<32xf32> to vector<1x32xf32>
    %cst_12 = arith.constant 8.000000e+00 : f32
    %22 = vector.broadcast %cst_12 : f32 to vector<1x32xf32>
    %23 = arith.divf %21, %22 : vector<1x32xf32>
    %24 = vector.broadcast %23 : vector<1x32xf32> to vector<8x32xf32>
    %25 = arith.subf %19, %24 : vector<8x32xf32>
    %26 = arith.mulf %25, %25 : vector<8x32xf32>
    %cst_13 = arith.constant dense<0.000000e+00> : vector<32xf32>
    %27 = vector.multi_reduction <add>, %26, %cst_13 [0] : vector<8x32xf32> to vector<32xf32>
    %28 = vector.shape_cast %27 : vector<32xf32> to vector<1x32xf32>
    %cst_14 = arith.constant 8.000000e+00 : f32
    %29 = vector.broadcast %cst_14 : f32 to vector<1x32xf32>
    %30 = arith.divf %28, %29 : vector<1x32xf32>
    %cst_15 = arith.constant 9.99999974E-6 : f32
    %31 = vector.broadcast %cst_15 : f32 to vector<1x32xf32>
    %32 = arith.addf %30, %31 : vector<1x32xf32>
    %33 = math.rsqrt %32 : vector<1x32xf32>
    %34 = arith.mulf %3, %33 : vector<1x32xf32>
    %35 = arith.mulf %23, %34 : vector<1x32xf32>
    %36 = arith.subf %4, %35 : vector<1x32xf32>
    %37 = vector.broadcast %34 : vector<1x32xf32> to vector<8x32xf32>
    %38 = arith.mulf %19, %37 : vector<8x32xf32>
    %39 = vector.broadcast %36 : vector<1x32xf32> to vector<8x32xf32>
    %40 = arith.addf %38, %39 : vector<8x32xf32>
    %cst_16 = arith.constant 0.000000e+00 : f32
    %41 = vector.broadcast %cst_16 : f32 to vector<8x32xf32>
    %42 = arith.maximumf %40, %41 : vector<8x32xf32>
    %c0_17 = arith.constant 0 : index
    %c0_18 = arith.constant 0 : index
    %43 = vector.load %arg3[%c0_17, %c0_18] : memref<32x128xf32, #tpu.memory_space<vmem>>, vector<32x128xf32>
    %cst_19 = arith.constant dense<0.000000e+00> : vector<8x128xf32>
    %44 = tpu.matmul %42, %43, %cst_19 {dimension_numbers = #tpu.dot_dimension_numbers<[1], [0], [0], [1], [0, 0, 1, 1], [], []>} : vector<8x32xf32>, vector<32x128xf32>, vector<8x128xf32> -> vector<8x128xf32>
    %45 = vector.broadcast %5 : vector<1x128xf32> to vector<8x128xf32>
    %46 = arith.addf %44, %45 : vector<8x128xf32>
    %c0_20 = arith.constant 0 : index
    %c0_21 = arith.constant 0 : index
    %47 = vector.load %arg5[%c0_20, %c0_21] : memref<8x128xf32, #tpu.memory_space<vmem>>, vector<8x128xf32>
    tpu.vector_store %arg5[%c0_20, %c0_21], %46 {strides = array<i32>} : memref<8x128xf32, #tpu.memory_space<vmem>>, vector<8x128xf32>,
    return
  }
}

</mosaic_0001>

<llo_original>
// kernel: tpu_custom_call.1
$region0: #{tpu_custom_call.1}
  #allocation0 [shape = 'u32[]', space=smem, size = 0x4, offset = 0x4, fixed_abs, tag = 'smem constant byte address 0x4 - core index']
  #allocation1 [shape = 'u32[144,128]{1,0:T(1,128)}', space=vmem, size = 0x12000, scoped, tag = 'internal scratch']
  %s0 = inlined_call_operand.vmem [shape: s32[8,8], index: 0, kind: input, shape index: {}]
  %s1 = inlined_call_operand.vmem [shape: f32[128,32], index: 1, kind: input, shape index: {}]
  %s2 = inlined_call_operand.vmem [shape: f32[32,32], index: 2, kind: input, shape index: {}]
  %s3 = inlined_call_operand.vmem [shape: f32[32,128], index: 3, kind: input, shape index: {}]
  %s4 = inlined_call_operand.vmem [shape: f32[4,128], index: 4, kind: input, shape index: {}]
  %s5 = inlined_call_operand.hbm [shape: f32[8,128], index: 5, kind: output, shape index: {}]
  %s6 = sld [smem:[#allocation0]]
  $region30: #{tpu_custom_call.1} parent=0
    _
  %s8 = ssub.s32 1, %s6
  %s9 = scalar_select 0, %s8, %s6
  $region1: #{tpu_custom_call.1} parent=0
    #allocation2 [shape = 'u8[4096]{0}', space=vmem, size = 0x1000, scoped, tag = 'output window, operand 0, single buffered']
    #allocation3 [shape = 's32[1]{0}', space=sflag, size = 0x4, scoped, tag = 'scoped memory for tpu_custom_call.1']
    %10 = vsyncpa [#allocation3], 0
    // Predicated region
    $region2: #{tpu_custom_call.1} parent=1 // pred_check
      _
    $region3: #{tpu_custom_call.1} parent=1 // pred_check_branch
      %12 = sbr.rel (0) target = $region5
    $region4: #{tpu_custom_call.1} parent=1 // pred_region
      _
    $region5: #{tpu_custom_call.1} parent=1 // pred_fallthru
      _
    // Predicated region
    $region6: #{tpu_custom_call.1} parent=1 // pred_check
      _
    $region7: #{tpu_custom_call.1} parent=1 // pred_check_branch
      %14 = sbr.rel (0) target = $region9
    $region8: #{tpu_custom_call.1} parent=1 // pred_region
      _
    $region9: #{tpu_custom_call.1} parent=1 // pred_fallthru
      _
    // Predicated region
    $region10: #{tpu_custom_call.1} parent=1 // pred_check
      _
    $region11: #{tpu_custom_call.1} parent=1 // pred_check_branch
      %16 = sbr.rel (0) target = $region13
    $region12: #{tpu_custom_call.1} parent=1 // pred_region
      _
    $region13: #{tpu_custom_call.1} parent=1 // pred_fallthru
      _
    // Predicated region
    $region14: #{tpu_custom_call.1} parent=1 // pred_check
      _
    $region15: #{tpu_custom_call.1} parent=1 // pred_check_branch
      %18 = sbr.rel (0) target = $region17
    $region16: #{tpu_custom_call.1} parent=1 // pred_region
      _
    $region17: #{tpu_custom_call.1} parent=1 // pred_fallthru
      _
    // Predicated region
    $region18: #{tpu_custom_call.1} parent=1 // pred_check
      _
    $region19: #{tpu_custom_call.1} parent=1 // pred_check_branch
      %20 = sbr.rel (0) target = $region21
    $region20: #{tpu_custom_call.1} parent=1 // pred_region
      _
    $region21: #{tpu_custom_call.1} parent=1 // pred_fallthru
      _
    %v21 = vld [vmem:[%s0] sm:$0xff]
    %v22 = vld [vmem:[%s4] sm:$0xf]
    %v23 = vlaneseq
    %v24 = vand.u32 %v23, 127
    %v25 = vlaneseq
    %v26 = vshrl.u32 %v25, 7
    %v27 = vsub.s32 0, %v26
    %v28 = vrot.slane %v21, %v27
    %30 = vbcast.lane.b32.xlu0 %v28, 256
    %v31 = vpop.permute.xlu0 %30
    %v32 = vlaneseq
    %v33 = vshrl.u32 %v32, 7
    %v34 = vsub.s32 1, %v33
    %v35 = vrot.slane %v21, %v34
    %37 = vbcast.lane.b32.xlu0 %v35, 256
    %v38 = vpop.permute.xlu0 %37
    %v39 = vlaneseq
    %v40 = vshrl.u32 %v39, 7
    %v41 = vsub.s32 2, %v40
    %v42 = vrot.slane %v21, %v41
    %44 = vbcast.lane.b32.xlu0 %v42, 256
    %v45 = vpop.permute.xlu0 %44
    %v46 = vlaneseq
    %v47 = vshrl.u32 %v46, 7
    %v48 = vsub.s32 3, %v47
    %v49 = vrot.slane %v21, %v48
    %51 = vbcast.lane.b32.xlu0 %v49, 256
    %v52 = vpop.permute.xlu0 %51
    %v53 = vlaneseq
    %v54 = vshrl.u32 %v53, 7
    %v55 = vsub.s32 4, %v54
    %v56 = vrot.slane %v21, %v55
    %58 = vbcast.lane.b32.xlu0 %v56, 256
    %v59 = vpop.permute.xlu0 %58
    %v60 = vlaneseq
    %v61 = vshrl.u32 %v60, 7
    %v62 = vsub.s32 5, %v61
    %v63 = vrot.slane %v21, %v62
    %65 = vbcast.lane.b32.xlu0 %v63, 256
    %v66 = vpop.permute.xlu0 %65
    %v67 = vlaneseq
    %v68 = vshrl.u32 %v67, 7
    %v69 = vsub.s32 6, %v68
    %v70 = vrot.slane %v21, %v69
    %72 = vbcast.lane.b32.xlu0 %v70, 256
    %v73 = vpop.permute.xlu0 %72
    %v74 = vlaneseq
    %v75 = vshrl.u32 %v74, 7
    %v76 = vsub.s32 7, %v75
    %v77 = vrot.slane %v21, %v76
    %79 = vbcast.lane.b32.xlu0 %v77, 256
    %v80 = vpop.permute.xlu0 %79
    %vm81 = vcmp.eq.s32.totalorder %v31, %v24
    %vm82 = vcmp.eq.s32.totalorder %v38, %v24
    %vm83 = vcmp.eq.s32.totalorder %v45, %v24
    %vm84 = vcmp.eq.s32.totalorder %v52, %v24
    %vm85 = vcmp.eq.s32.totalorder %v59, %v24
    %vm86 = vcmp.eq.s32.totalorder %v66, %v24
    %vm87 = vcmp.eq.s32.totalorder %v73, %v24
    %vm88 = vcmp.eq.s32.totalorder %v80, %v24
    %v89 = vsel %vm81, 0.125, 0.0
    %v90 = vsel %vm82, 0.125, 0.0
    %v91 = vsel %vm83, 0.125, 0.0
    %v92 = vsel %vm84, 0.125, 0.0
    %v93 = vsel %vm85, 0.125, 0.0
    %v94 = vsel %vm86, 0.125, 0.0
    %v95 = vsel %vm87, 0.125, 0.0
    %v96 = vsel %vm88, 0.125, 0.0
    %v97 = vrot.slane %v89, 4
    %v98 = vadd.f32 %v89, %v97
    %v99 = vrot.slane %v98, 2
    %v100 = vadd.f32 %v98, %v99
    %v101 = vrot.slane %v100, 1
    %v102 = vadd.f32 %v100, %v101
    %v103 = vrot.slane %v90, 4
    %v104 = vadd.f32 %v90, %v103
    %v105 = vrot.slane %v104, 2
    %v106 = vadd.f32 %v104, %v105
    %v107 = vrot.slane %v106, 1
    %v108 = vadd.f32 %v106, %v107
    %v109 = vrot.slane %v91, 4
    %v110 = vadd.f32 %v91, %v109
    %v111 = vrot.slane %v110, 2
    %v112 = vadd.f32 %v110, %v111
    %v113 = vrot.slane %v112, 1
    %v114 = vadd.f32 %v112, %v113
    %v115 = vrot.slane %v92, 4
    %v116 = vadd.f32 %v92, %v115
    %v117 = vrot.slane %v116, 2
    %v118 = vadd.f32 %v116, %v117
    %v119 = vrot.slane %v118, 1
    %v120 = vadd.f32 %v118, %v119
    %v121 = vrot.slane %v93, 4
    %v122 = vadd.f32 %v93, %v121
    %v123 = vrot.slane %v122, 2
    %v124 = vadd.f32 %v122, %v123
    %v125 = vrot.slane %v124, 1
    %v126 = vadd.f32 %v124, %v125
    %v127 = vrot.slane %v94, 4
    %v128 = vadd.f32 %v94, %v127
    %v129 = vrot.slane %v128, 2
    %v130 = vadd.f32 %v128, %v129
    %v131 = vrot.slane %v130, 1
    %v132 = vadd.f32 %v130, %v131
    %v133 = vrot.slane %v95, 4
    %v134 = vadd.f32 %v95, %v133
    %v135 = vrot.slane %v134, 2
    %v136 = vadd.f32 %v134, %v135
    %v137 = vrot.slane %v136, 1
    %v138 = vadd.f32 %v136, %v137
    %v139 = vrot.slane %v96, 4
    %v140 = vadd.f32 %v96, %v139
    %v141 = vrot.slane %v140, 2
    %v142 = vadd.f32 %v140, %v141
    %v143 = vrot.slane %v142, 1
    %v144 = vadd.f32 %v142, %v143
    %v145 = vld [vmem:[%s1] sm:$0xff]
    %v146 = vld [vmem:[%s1 + $0x8] sm:$0xff]
    %v147 = vld [vmem:[%s1 + $0x10] sm:$0xff]
    %v148 = vld [vmem:[%s1 + $0x18] sm:$0xff]
    %v149 = vld [vmem:[%s1 + $0x20] sm:$0xff]
    %v150 = vld [vmem:[%s1 + $0x28] sm:$0xff]
    %v151 = vld [vmem:[%s1 + $0x30] sm:$0xff]
    %v152 = vld [vmem:[%s1 + $0x38] sm:$0xff]
    %v153 = vld [vmem:[%s1 + $0x40] sm:$0xff]
    %v154 = vld [vmem:[%s1 + $0x48] sm:$0xff]
    %v155 = vld [vmem:[%s1 + $0x50] sm:$0xff]
    %v156 = vld [vmem:[%s1 + $0x58] sm:$0xff]
    %v157 = vld [vmem:[%s1 + $0x60] sm:$0xff]
    %v158 = vld [vmem:[%s1 + $0x68] sm:$0xff]
    %v159 = vld [vmem:[%s1 + $0x70] sm:$0xff]
    %v160 = vld [vmem:[%s1 + $0x78] sm:$0xff]
    %vm169 = vcmask 1041409
    %v170 = vsel %vm169, %v108, %v102
    %vm171 = vcmask 1042434
    %v172 = vsel %vm171, %v114, %v170
    %vm173 = vcmask 1043459
    %v174 = vsel %vm173, %v120, %v172
    %vm175 = vcmask 1044484
    %v176 = vsel %vm175, %v126, %v174
    %vm177 = vcmask 1045509
    %v178 = vsel %vm177, %v132, %v176
    %vm179 = vcmask 1046534
    %v180 = vsel %vm179, %v138, %v178
    %vm181 = vcmask 1047559
    %v182 = vsel %vm181, %v144, %v180
    %184 = vmatprep.subr.mxu0 0.0
    %185 = vmatpush1.msra.mxu0 %v160
    %186 = vmatprep.subr.mxu0 0.0
    %187 = vmatpush1.msra.mxu0 %v159
    %188 = vmatprep.subr.mxu0 0.0
    %189 = vmatpush1.msra.mxu0 %v158
    %190 = vmatprep.subr.mxu0 0.0
    %191 = vmatpush1.msra.mxu0 %v157
    %192 = vmatprep.subr.mxu0 0.0
    %193 = vmatpush1.msra.mxu0 %v156
    %194 = vmatprep.subr.mxu0 0.0
    %195 = vmatpush1.msra.mxu0 %v155
    %196 = vmatprep.subr.mxu0 0.0
    %197 = vmatpush1.msra.mxu0 %v154
    %198 = vmatprep.subr.mxu0 0.0
    %199 = vmatpush1.msra.mxu0 %v153
    %200 = vmatprep.subr.mxu0 0.0
    %201 = vmatpush1.msra.mxu0 %v152
    %202 = vmatprep.subr.mxu0 0.0
    %203 = vmatpush1.msra.mxu0 %v151
    %204 = vmatprep.subr.mxu0 0.0
    %205 = vmatpush1.msra.mxu0 %v150
    %206 = vmatprep.subr.mxu0 0.0
    %207 = vmatpush1.msra.mxu0 %v149
    %208 = vmatprep.subr.mxu0 0.0
    %209 = vmatpush1.msra.mxu0 %v148
    %210 = vmatprep.subr.mxu0 0.0
    %211 = vmatpush1.msra.mxu0 %v147
    %212 = vmatprep.subr.mxu0 0.0
    %213 = vmatpush1.msra.mxu0 %v146
    %214 = vmatprep.subr.mxu0 0.0
    %215 = vmatpush1.msra.mxu0 %v145
    %216 = vmatprep.subr.mxu0 0.0
    %217 = vmatpush2.msra.mxu0 0.0
    %218 = vmatprep.subr.mxu0 0.0
    %219 = vmatpush2.msra.mxu0 0.0
    %220 = vmatprep.subr.mxu0 0.0
    %221 = vmatpush2.msra.mxu0 0.0
    %222 = vmatprep.subr.mxu0 0.0
    %223 = vmatpush2.msra.mxu0 0.0
    %224 = vmatprep.subr.mxu0 0.0
    %225 = vmatpush2.msra.mxu0 0.0
    %226 = vmatprep.subr.mxu0 0.0
    %227 = vmatpush2.msra.mxu0 0.0
    %228 = vmatprep.subr.mxu0 0.0
    %229 = vmatpush2.msra.mxu0 0.0
    %230 = vmatprep.subr.mxu0 0.0
    %231 = vmatpush2.msra.mxu0 0.0
    %232 = vmatprep.subr.mxu0 0.0
    %233 = vmatpush2.msra.mxu0 0.0
    %234 = vmatprep.subr.mxu0 0.0
    %235 = vmatpush2.msra.mxu0 0.0
    %236 = vmatprep.subr.mxu0 0.0
    %237 = vmatpush2.msra.mxu0 0.0
    %238 = vmatprep.subr.mxu0 0.0
    %239 = vmatpush2.msra.mxu0 0.0
    %240 = vmatprep.subr.mxu0 0.0
    %241 = vmatpush2.msra.mxu0 0.0
    %242 = vmatprep.subr.mxu0 0.0
    %243 = vmatpush2.msra.mxu0 0.0
    %244 = vmatprep.subr.mxu0 0.0
    %245 = vmatpush2.msra.mxu0 0.0
    %246 = vmatprep.subr.mxu0 0.0
    %247 = vmatpush2.msra.mxu0 0.0
    %248 = vmatprep.mubr.f32.mxu0 0.0
    %249 = vmatmul.mubr.f32.gmra.mxu0 %v182
    %v250 = vpop.f32.mrf.mxu0
    %v251 = vadd.f32 0.0, %v250
    %v252 = vpop.f32.mrf.mxu0
    %253 = vdwg.mxu0
    %v254 = vld [vmem:[%s2] sm:$0xff]
    %v255 = vld [vmem:[%s2 + $0x8] sm:$0xff]
    %v256 = vld [vmem:[%s2 + $0x10] sm:$0xff]
    %v257 = vld [vmem:[%s2 + $0x18] sm:$0xff]
    %v258 = vlaneseq
    %v259 = vshrl.u32 %v258, 7
    %v260 = vsub.s32 0, %v259
    %v261 = vrot.slane %v22, %v260
    %vm262 = vcmask 261120
    %v264 = vsel %vm262, %v251, 0
    %266 = vmatprep.subr.mxu0 0.0
    %267 = vmatpush1.msra.mxu0 0.0
    %268 = vmatprep.subr.mxu0 0.0
    %269 = vmatpush1.msra.mxu0 0.0
    %270 = vmatprep.subr.mxu0 0.0
    %271 = vmatpush1.msra.mxu0 0.0
    %272 = vmatprep.subr.mxu0 0.0
    %273 = vmatpush1.msra.mxu0 0.0
    %274 = vmatprep.subr.mxu0 0.0
    %275 = vmatpush1.msra.mxu0 0.0
    %276 = vmatprep.subr.mxu0 0.0
    %277 = vmatpush1.msra.mxu0 0.0
    %278 = vmatprep.subr.mxu0 0.0
    %279 = vmatpush1.msra.mxu0 0.0
    %280 = vmatprep.subr.mxu0 0.0
    %281 = vmatpush1.msra.mxu0 0.0
    %282 = vmatprep.subr.mxu0 0.0
    %283 = vmatpush1.msra.mxu0 0.0
    %284 = vmatprep.subr.mxu0 0.0
    %285 = vmatpush1.msra.mxu0 0.0
    %286 = vmatprep.subr.mxu0 0.0
    %287 = vmatpush1.msra.mxu0 0.0
    %288 = vmatprep.subr.mxu0 0.0
    %289 = vmatpush1.msra.mxu0 0.0
    %290 = vmatprep.subr.mxu0 0.0
    %291 = vmatpush1.msra.mxu0 %v257
    %292 = vmatprep.subr.mxu0 0.0
    %293 = vmatpush1.msra.mxu0 %v256
    %294 = vmatprep.subr.mxu0 0.0
    %295 = vmatpush1.msra.mxu0 %v255
    %296 = vmatprep.subr.mxu0 0.0
    %297 = vmatpush1.msra.mxu0 %v254
    %298 = vmatprep.subr.mxu0 0.0
    %299 = vmatpush2.msra.mxu0 0.0
    %300 = vmatprep.subr.mxu0 0.0
    %301 = vmatpush2.msra.mxu0 0.0
    %302 = vmatprep.subr.mxu0 0.0
    %303 = vmatpush2.msra.mxu0 0.0
    %304 = vmatprep.subr.mxu0 0.0
    %305 = vmatpush2.msra.mxu0 0.0
    %306 = vmatprep.subr.mxu0 0.0
    %307 = vmatpush2.msra.mxu0 0.0
    %308 = vmatprep.subr.mxu0 0.0
    %309 = vmatpush2.msra.mxu0 0.0
    %310 = vmatprep.subr.mxu0 0.0
    %311 = vmatpush2.msra.mxu0 0.0
    %312 = vmatprep.subr.mxu0 0.0
    %313 = vmatpush2.msra.mxu0 0.0
    %314 = vmatprep.subr.mxu0 0.0
    %315 = vmatpush2.msra.mxu0 0.0
    %316 = vmatprep.subr.mxu0 0.0
    %317 = vmatpush2.msra.mxu0 0.0
    %318 = vmatprep.subr.mxu0 0.0
    %319 = vmatpush2.msra.mxu0 0.0
    %320 = vmatprep.subr.mxu0 0.0
    %321 = vmatpush2.msra.mxu0 0.0
    %322 = vmatprep.subr.mxu0 0.0
    %323 = vmatpush2.msra.mxu0 0.0
    %324 = vmatprep.subr.mxu0 0.0
    %325 = vmatpush2.msra.mxu0 0.0
    %326 = vmatprep.subr.mxu0 0.0
    %327 = vmatpush2.msra.mxu0 0.0
    %328 = vmatprep.subr.mxu0 0.0
    %329 = vmatpush2.msra.mxu0 0.0
    %330 = vmatprep.mubr.f32.mxu0 0.0
    %331 = vmatmul.mubr.f32.gmra.mxu0 %v264
    %v332 = vpop.f32.mrf.mxu0
    %v333 = vadd.f32 %v261, %v332
    %v334 = vpop.f32.mrf.mxu0
    %335 = vdwg.mxu0
    %v336 = vsel %vm262, %v333, 0.0
    %v337 = vrot.slane %v336, 4
    %v338 = vadd.f32 %v336, %v337
    %v339 = vrot.slane %v338, 2
    %v340 = vadd.f32 %v338, %v339
    %v341 = vrot.slane %v340, 1
    %v342 = vadd.f32 %v340, %v341
    %v343 = vrcp.pop 8.0
    %v344 = vmul.f32 %v342, %v343
    %v345 = vsub.f32 %v333, %v344
    %v346 = vmul.f32 %v345, %v345
    %v347 = vsel %vm262, %v346, 0.0
    %v348 = vrot.slane %v347, 4
    %v349 = vadd.f32 %v347, %v348
    %v350 = vrot.slane %v349, 2
    %v351 = vadd.f32 %v349, %v350
    %v352 = vrot.slane %v351, 1
    %v353 = vadd.f32 %v351, %v352
    %v354 = vmul.f32 %v353, %v343
    %v355 = vadd.f32 %v354, 1e-05
    %v356 = vrsqrt.pop %v355
    %v357 = vmul.f32 %v22, %v356
    %v358 = vmul.f32 %v344, %v357
    %v360 = vrot.slane %v358, 7
    %v362 = vsub.f32 %v22, %v360
    %v363 = vlaneseq
    %v364 = vshrl.u32 %v363, 7
    %v365 = vsub.s32 1, %v364
    %v366 = vrot.slane %v357, %v365
    %v367 = vmul.f32 %v333, %v366
    %v368 = vlaneseq
    %v369 = vshrl.u32 %v368, 7
    %v370 = vsub.s32 2, %v369
    %v371 = vrot.slane %v362, %v370
    %v372 = vadd.f32 %v367, %v371
    %v373 = vmax.f32 %v372, 0.0
    %v374 = vld [vmem:[%s3] sm:$0xff]
    %v375 = vld [vmem:[%s3 + $0x8] sm:$0xff]
    %v376 = vld [vmem:[%s3 + $0x10] sm:$0xff]
    %v377 = vld [vmem:[%s3 + $0x18] sm:$0xff]
    %v378 = vlaneseq
    %v379 = vshrl.u32 %v378, 7
    %v380 = vsub.s32 3, %v379
    %v381 = vrot.slane %v22, %v380
    %v383 = vsel %vm262, %v373, 0
    %385 = vmatprep.subr.mxu0 0.0
    %386 = vmatpush1.msra.mxu0 0.0
    %387 = vmatprep.subr.mxu0 0.0
    %388 = vmatpush1.msra.mxu0 0.0
    %389 = vmatprep.subr.mxu0 0.0
    %390 = vmatpush1.msra.mxu0 0.0
    %391 = vmatprep.subr.mxu0 0.0
    %392 = vmatpush1.msra.mxu0 0.0
    %393 = vmatprep.subr.mxu0 0.0
    %394 = vmatpush1.msra.mxu0 0.0
    %395 = vmatprep.subr.mxu0 0.0
    %396 = vmatpush1.msra.mxu0 0.0
    %397 = vmatprep.subr.mxu0 0.0
    %398 = vmatpush1.msra.mxu0 0.0
    %399 = vmatprep.subr.mxu0 0.0
    %400 = vmatpush1.msra.mxu0 0.0
    %401 = vmatprep.subr.mxu0 0.0
    %402 = vmatpush1.msra.mxu0 0.0
    %403 = vmatprep.subr.mxu0 0.0
    %404 = vmatpush1.msra.mxu0 0.0
    %405 = vmatprep.subr.mxu0 0.0
    %406 = vmatpush1.msra.mxu0 0.0
    %407 = vmatprep.subr.mxu0 0.0
    %408 = vmatpush1.msra.mxu0 0.0
    %409 = vmatprep.subr.mxu0 0.0
    %410 = vmatpush1.msra.mxu0 %v377
    %411 = vmatprep.subr.mxu0 0.0
    %412 = vmatpush1.msra.mxu0 %v376
    %413 = vmatprep.subr.mxu0 0.0
    %414 = vmatpush1.msra.mxu0 %v375
    %415 = vmatprep.subr.mxu0 0.0
    %416 = vmatpush1.msra.mxu0 %v374
    %417 = vmatprep.subr.mxu0 0.0
    %418 = vmatpush2.msra.mxu0 0.0
    %419 = vmatprep.subr.mxu0 0.0
    %420 = vmatpush2.msra.mxu0 0.0
    %421 = vmatprep.subr.mxu0 0.0
    %422 = vmatpush2.msra.mxu0 0.0
    %423 = vmatprep.subr.mxu0 0.0
    %424 = vmatpush2.msra.mxu0 0.0
    %425 = vmatprep.subr.mxu0 0.0
    %426 = vmatpush2.msra.mxu0 0.0
    %427 = vmatprep.subr.mxu0 0.0
    %428 = vmatpush2.msra.mxu0 0.0
    %429 = vmatprep.subr.mxu0 0.0
    %430 = vmatpush2.msra.mxu0 0.0
    %431 = vmatprep.subr.mxu0 0.0
    %432 = vmatpush2.msra.mxu0 0.0
    %433 = vmatprep.subr.mxu0 0.0
    %434 = vmatpush2.msra.mxu0 0.0
    %435 = vmatprep.subr.mxu0 0.0
    %436 = vmatpush2.msra.mxu0 0.0
    %437 = vmatprep.subr.mxu0 0.0
    %438 = vmatpush2.msra.mxu0 0.0
    %439 = vmatprep.subr.mxu0 0.0
    %440 = vmatpush2.msra.mxu0 0.0
    %441 = vmatprep.subr.mxu0 0.0
    %442 = vmatpush2.msra.mxu0 0.0
    %443 = vmatprep.subr.mxu0 0.0
    %444 = vmatpush2.msra.mxu0 0.0
    %445 = vmatprep.subr.mxu0 0.0
    %446 = vmatpush2.msra.mxu0 0.0
    %447 = vmatprep.subr.mxu0 0.0
    %448 = vmatpush2.msra.mxu0 0.0
    %449 = vmatprep.mubr.f32.mxu0 0.0
    %450 = vmatmul.mubr.f32.gmra.mxu0 %v383
    %v451 = vpop.f32.mrf.mxu0
    %v452 = vadd.f32 %v381, %v451
    %v453 = vpop.f32.mrf.mxu0
    %454 = vdwg.mxu0
    %455 = vst [vmem:[#allocation2] sm:$0xff] %v452
    // Predicated region
    $region22: #{tpu_custom_call.1} parent=1 // pred_check
      _
    $region23: #{tpu_custom_call.1} parent=1 // pred_check_branch
      %457 = sbr.rel (0) target = $region25
    $region24: #{tpu_custom_call.1} parent=1 // pred_region
      %s459 = ssub.s32 128, 128
      %460 = vsyncadd [#allocation3], %s459
      %s462 = sshll.u32 [#allocation2], 4
      %s463 = int_to_ptr.vmem [resolvable:$true] %s462
      %465 = dma.vmem_to_hbm [thread:$0]  %s463, 128, %s5, [#allocation3]
    $region25: #{tpu_custom_call.1} parent=1 // pred_fallthru
      _
    // Predicated region
    $region26: #{tpu_custom_call.1} parent=1 // pred_check
      _
    $region27: #{tpu_custom_call.1} parent=1 // pred_check_branch
      %467 = sbr.rel (0) target = $region29
    $region28: #{tpu_custom_call.1} parent=1 // pred_region
      %468 = dma.done [#allocation3], 128
    $region29: #{tpu_custom_call.1} parent=1 // pred_fallthru
      _
    %469 = vsyncpa [#allocation3], 1

</llo_original>
